<compile_context>
chip_gen: v6e
topology: v6e:2x2x1
jax: 0.10.0
libtpu: 0.0.40
codegen_flags: <defaults>
</compile_context>

<pallas_src>
from typing import List

import jax
import jax.numpy as jnp
from jax.experimental import pallas as pl
from jax.experimental.pallas import tpu as pltpu


def _round_up(x: int, m: int) -> int:
    return ((x + m - 1) // m) * m


# ---------------------------------------------------------------------------
# Pallas kernel: lane-dense softmax-CE + soft-dice partial statistics.
# Grid = (N, num_pixel_chunks); outputs are per-N resident accumulators.
# ---------------------------------------------------------------------------
def _seg_stats_kernel(logits_ref, tgt_ref, ce_ref, inter_ref, psum_ref, tsum_ref):
    j = pl.program_id(1)

    @pl.when(j == 0)
    def _():
        ce_ref[...] = jnp.zeros_like(ce_ref)
        inter_ref[...] = jnp.zeros_like(inter_ref)
        psum_ref[...] = jnp.zeros_like(psum_ref)
        tsum_ref[...] = jnp.zeros_like(tsum_ref)

    x = logits_ref[...].astype(jnp.float32)        # (C, T): classes on sublanes, pixels on lanes
    tgt = tgt_ref[...]                             # (1, T) int32; -1 marks padded lanes
    c, t = x.shape

    validf = (tgt >= 0).astype(jnp.float32)        # (1, T)

    # numerically stable softmax over the (small) class/sublane axis
    m = jnp.max(x, axis=0, keepdims=True)          # (1, T)
    z = x - m
    e = jnp.exp(z)
    s = jnp.sum(e, axis=0, keepdims=True)          # (1, T)
    probs = e * pl.reciprocal(s, approx=True)      # (C, T)

    cls = jax.lax.broadcasted_iota(jnp.int32, (c, t), 0)
    onehot = (cls == tgt).astype(jnp.float32)      # (C, T); all-zero on padded lanes

    # per-pixel CE: logsumexp(x) - x[target] = log(s) - z[target]
    ce_pix = jnp.log(s) - jnp.sum(z * onehot, axis=0, keepdims=True)   # (1, T)

    # lane-dense partial accumulators (pure VPU adds; no scalar reduce in the loop)
    ce_ref[...] += ce_pix * validf
    inter_ref[...] += probs * onehot
    psum_ref[...] += probs * validf
    tsum_ref[...] += onehot


def seg_stats(logits_nchw, target_nhw, *, max_tile_p: int = 4096,
              vmem_tile_budget: int = 8 << 20):
    """Returns (ce_sum, intersection[C], prob_sum[C], target_sum[C], num_pixels)."""
    n, c, h, w = logits_nchw.shape
    hw = h * w
    p = n * hw

    # Lane tile: multiple of 128, capped by a VMEM budget for the
    # double-buffered logits stream (keeps v5e/v7x scoped VMEM happy for big C).
    itemsize = jnp.dtype(logits_nchw.dtype).itemsize
    cap = max(128, (vmem_tile_budget // (2 * max(c, 1) * itemsize)) // 128 * 128)
    tile_p = int(min(max_tile_p, cap, _round_up(hw, 128)))
    hw_pad = _round_up(hw, tile_p)

    # Free, contiguous reshapes: no HBM transpose pass, keep the network dtype.
    x = logits_nchw.reshape(n, c, hw)
    t = target_nhw.reshape(n, 1, hw).astype(jnp.int32)
    if hw_pad != hw:
        x = jnp.pad(x, ((0, 0), (0, 0), (0, hw_pad - hw)))
        t = jnp.pad(t, ((0, 0), (0, 0), (0, hw_pad - hw)), constant_values=-1)

    grid = (n, hw_pad // tile_p)

    ce_p, inter_p, psum_p, tsum_p = pl.pallas_call(
        _seg_stats_kernel,
        out_shape=(
            jax.ShapeDtypeStruct((n, 1, tile_p), jnp.float32),
            jax.ShapeDtypeStruct((n, c, tile_p), jnp.float32),
            jax.ShapeDtypeStruct((n, c, tile_p), jnp.float32),
            jax.ShapeDtypeStruct((n, c, tile_p), jnp.float32),
        ),
        grid_spec=pltpu.PrefetchScalarGridSpec(
            num_scalar_prefetch=0,
            grid=grid,
            in_specs=[
                pl.BlockSpec((None, c, tile_p), lambda ni, j: (ni, 0, j)),
                pl.BlockSpec((None, 1, tile_p), lambda ni, j: (ni, 0, j)),
            ],
            out_specs=(
                pl.BlockSpec((None, 1, tile_p), lambda ni, j: (ni, 0, 0)),
                pl.BlockSpec((None, c, tile_p), lambda ni, j: (ni, 0, 0)),
                pl.BlockSpec((None, c, tile_p), lambda ni, j: (ni, 0, 0)),
                pl.BlockSpec((None, c, tile_p), lambda ni, j: (ni, 0, 0)),
            ),
        ),
        compiler_params=pltpu.CompilerParams(
            dimension_semantics=("parallel", "arbitrary"),
        ),
    )(x, t)

    # tiny epilogue reductions in plain JAX
    ce_sum = jnp.sum(ce_p)
    inter = jnp.sum(inter_p, axis=(0, 2))
    psum = jnp.sum(psum_p, axis=(0, 2))
    tsum = jnp.sum(tsum_p, axis=(0, 2))
    return ce_sum, inter, psum, tsum, p


# ---------------------------------------------------------------------------
# Concrete sub-losses (each returns a dict keyed by its loss_name, mirroring
# the PyTorch loss-module convention used by MixSegLoss*).  They accept an
# optional precomputed `stats` so containers can share one kernel launch.
# ---------------------------------------------------------------------------
class SegCrossEntropyLoss:
    # TODO(synk): no ignore_index semantics (torch CrossEntropyLoss(ignore_index=...));
    # the kernel only masks negative targets (used for lane padding).
    def __init__(self, loss_name: str = "ce_loss"):
        self.loss_name = loss_name

    def __call__(self, pred, target, stats=None):
        if stats is None:
            stats = seg_stats(pred, target)
        ce_sum, _, _, _, p = stats
        return {self.loss_name: ce_sum / jnp.float32(p)}


class SoftDiceLoss:
    """Returns two keys -> exercises the multi-key branch of MixSegLossMultipreds."""

    def __init__(self, loss_name: str = "dice_loss", eps: float = 1e-6):
        self.loss_name = loss_name
        self.eps = eps

    def __call__(self, pred, target, stats=None):
        if stats is None:
            stats = seg_stats(pred, target)
        _, inter, psum, tsum, _ = stats
        dice = 1.0 - (2.0 * inter + self.eps) / (psum + tsum + self.eps)  # (C,)
        return {
            self.loss_name: jnp.mean(dice),
            self.loss_name + "_fg": jnp.mean(dice[1:]),  # exclude background class 0
        }


# ---------------------------------------------------------------------------
# MixSegLoss / MixSegLossMultipreds — faithful JAX port of forward semantics.
# ---------------------------------------------------------------------------
class MixSegLoss:
    def __init__(self, losses: List, losses_weight: List[float] = None):
        assert losses is not None
        self.losses_name = []
        self.losses = []
        self.loss_name = "mixsegloss"
        for loss in losses:
            self.losses.append(loss)
            self.losses_name.append(loss.loss_name)
        if losses_weight is None:
            losses_weight = [1.0 for _ in range(len(losses))]
        self.losses_weight = losses_weight

    def __call__(self, pred, target):
        # Shared pred/target: compute the streaming statistics with ONE kernel
        # launch and reuse them for every sub-loss.
        stats = seg_stats(pred, target)
        losses_res = {}
        for idx, loss in enumerate(self.losses):
            loss_name = self.losses_name[idx]
            loss_val = loss(pred, target, stats=stats)[loss_name] * self.losses_weight[idx]
            losses_res[loss_name] = loss_val
        return losses_res


class MixSegLossMultipreds(MixSegLoss):
    def __init__(self, losses: List, losses_weight: List[float] = None):
        super().__init__(losses, losses_weight)
        self.loss_name = "multipredsloss"

    def __call__(self, pred, target):
        assert isinstance(pred, list)
        losses_res = {}
        for idx, loss in enumerate(self.losses):
            loss_name = self.losses_name[idx]
            # one kernel launch per (pred[idx], target[idx]) pair; all statistics
            # for that pair come out of the same call.
            stats = seg_stats(pred[idx], target[idx])
            loss_val = loss(pred[idx], target[idx], stats=stats)
            if len(loss_val.keys()) > 1:
                for key, item in loss_val.items():
                    loss_val[key] = item * self.losses_weight[idx]
                losses_res.update(loss_val)
            else:
                loss_val_item = loss_val[loss_name] * self.losses_weight[idx]
                losses_res[loss_name] = loss_val_item
        return losses_res


# ---------------------------------------------------------------------------
if __name__ == "__main__":
    key = jax.random.PRNGKey(0)
    k0, k1, k2, k3 = jax.random.split(key, 4)

    N, C, H, W = 2, 4, 16, 16  # small shapes; P = N*H*W = 512 pixels

    pred0 = jax.random.normal(k0, (N, C, H, W), dtype=jnp.float32)
    tgt0 = jax.random.randint(k1, (N, H, W), 0, C, dtype=jnp.int32)
    pred1 = jax.random.normal(k2, (N, C, H, W), dtype=jnp.float32)
    tgt1 = jax.random.randint(k3, (N, H, W), 0, C, dtype=jnp.int32)

    # deterministic "parameters": the per-loss weights
    module = MixSegLossMultipreds(
        losses=[SegCrossEntropyLoss("ce_loss"), SoftDiceLoss("dice_loss")],
        losses_weight=[1.0, 0.5],
    )

    out = module([pred0, pred1], [tgt0, tgt1])
    out = {k: jax.block_until_ready(v) for k, v in out.items()}

    # sanity: expected keys exist and are finite scalars
    assert set(out.keys()) == {"ce_loss", "dice_loss", "dice_loss_fg"}
    for v in out.values():
        assert v.shape == () and bool(jnp.isfinite(v))

    # cross-check against a plain-JAX reference for the first pred/target pair
    def ref_stats(logits, tgt):
        x = jnp.transpose(logits, (0, 2, 3, 1)).reshape(-1, C).astype(jnp.float32)
        t = tgt.reshape(-1)
        lse = jax.nn.logsumexp(x, axis=-1)
        ce = jnp.mean(lse - x[jnp.arange(x.shape[0]), t])
        probs = jax.nn.softmax(x, axis=-1)
        onehot = jax.nn.one_hot(t, C, dtype=jnp.float32)
        return ce, (probs * onehot).sum(0), probs.sum(0), onehot.sum(0)

    ce_ref, _, _, _ = ref_stats(pred0, tgt0)
    assert jnp.allclose(out["ce_loss"], ce_ref, rtol=2e-3, atol=2e-3)

    print("KERNEL_OK")
</pallas_src>

<mosaic_0001>
module attributes {stable_mosaic.version = 11 : i64} {
  func.func @_seg_stats_kernel(%arg0: i32, %arg1: i32, %arg2: memref<1x4x256xf32, #tpu.memory_space<vmem>>, %arg3: memref<1x1x256xi32, #tpu.memory_space<vmem>>, %arg4: memref<1x1x256xf32, #tpu.memory_space<vmem>>, %arg5: memref<1x4x256xf32, #tpu.memory_space<vmem>>, %arg6: memref<1x4x256xf32, #tpu.memory_space<vmem>>, %arg7: memref<1x4x256xf32, #tpu.memory_space<vmem>>) attributes {dimension_semantics = [#tpu.dimension_semantics<parallel>, #tpu.dimension_semantics<arbitrary>], iteration_bounds = array<i64: 2, 1>, scalar_prefetch = 0 : i64, scratch_operands = 0 : i64, tpu.core_type = #tpu.core_type<tc>, window_params = [{transform_indices = @transform_0, window_bounds = array<i64: 1, 4, 256>}, {transform_indices = @transform_1, window_bounds = array<i64: 1, 1, 256>}, {transform_indices = @transform_2, window_bounds = array<i64: 1, 1, 256>}, {transform_indices = @transform_3, window_bounds = array<i64: 1, 4, 256>}, {transform_indices = @transform_4, window_bounds = array<i64: 1, 4, 256>}, {transform_indices = @transform_5, window_bounds = array<i64: 1, 4, 256>}]} {
    %c0_i32 = arith.constant 0 : i32
    %0 = arith.cmpi eq, %arg1, %c0_i32 : i32
    %1 = arith.extui %0 : i1 to i32
    %c0_i32_0 = arith.constant 0 : i32
    %2 = arith.cmpi ne, %1, %c0_i32_0 : i32
    scf.if %2 {
      %cst_33 = arith.constant 0.000000e+00 : f32
      %59 = vector.broadcast %cst_33 : f32 to vector<1x256xf32>
      %c0_34 = arith.constant 0 : index
      %c0_35 = arith.constant 0 : index
      %c0_36 = arith.constant 0 : index
      %60 = vector.load %arg4[%c0_34, %c0_35, %c0_36] : memref<1x1x256xf32, #tpu.memory_space<vmem>>, vector<1x1x256xf32>
      %61 = vector.shape_cast %60 : vector<1x1x256xf32> to vector<1x256xf32>
      %62 = vector.shape_cast %59 : vector<1x256xf32> to vector<1x1x256xf32>
      tpu.vector_store %arg4[%c0_34, %c0_35, %c0_36], %62 {strides = array<i32>} : memref<1x1x256xf32, #tpu.memory_space<vmem>>, vector<1x1x256xf32>,
      %cst_37 = arith.constant 0.000000e+00 : f32
      %63 = vector.broadcast %cst_37 : f32 to vector<4x256xf32>
      %c0_38 = arith.constant 0 : index
      %c0_39 = arith.constant 0 : index
      %c0_40 = arith.constant 0 : index
      %64 = vector.load %arg5[%c0_38, %c0_39, %c0_40] : memref<1x4x256xf32, #tpu.memory_space<vmem>>, vector<1x4x256xf32>
      %65 = vector.shape_cast %64 : vector<1x4x256xf32> to vector<4x256xf32>
      %66 = vector.shape_cast %63 : vector<4x256xf32> to vector<1x4x256xf32>
      tpu.vector_store %arg5[%c0_38, %c0_39, %c0_40], %66 {strides = array<i32>} : memref<1x4x256xf32, #tpu.memory_space<vmem>>, vector<1x4x256xf32>,
      %cst_41 = arith.constant 0.000000e+00 : f32
      %67 = vector.broadcast %cst_41 : f32 to vector<4x256xf32>
      %c0_42 = arith.constant 0 : index
      %c0_43 = arith.constant 0 : index
      %c0_44 = arith.constant 0 : index
      %68 = vector.load %arg6[%c0_42, %c0_43, %c0_44] : memref<1x4x256xf32, #tpu.memory_space<vmem>>, vector<1x4x256xf32>
      %69 = vector.shape_cast %68 : vector<1x4x256xf32> to vector<4x256xf32>
      %70 = vector.shape_cast %67 : vector<4x256xf32> to vector<1x4x256xf32>
      tpu.vector_store %arg6[%c0_42, %c0_43, %c0_44], %70 {strides = array<i32>} : memref<1x4x256xf32, #tpu.memory_space<vmem>>, vector<1x4x256xf32>,
      %cst_45 = arith.constant 0.000000e+00 : f32
      %71 = vector.broadcast %cst_45 : f32 to vector<4x256xf32>
      %c0_46 = arith.constant 0 : index
      %c0_47 = arith.constant 0 : index
      %c0_48 = arith.constant 0 : index
      %72 = vector.load %arg7[%c0_46, %c0_47, %c0_48] : memref<1x4x256xf32, #tpu.memory_space<vmem>>, vector<1x4x256xf32>
      %73 = vector.shape_cast %72 : vector<1x4x256xf32> to vector<4x256xf32>
      %74 = vector.shape_cast %71 : vector<4x256xf32> to vector<1x4x256xf32>
      tpu.vector_store %arg7[%c0_46, %c0_47, %c0_48], %74 {strides = array<i32>} : memref<1x4x256xf32, #tpu.memory_space<vmem>>, vector<1x4x256xf32>,
    } else {
    }
    %c0 = arith.constant 0 : index
    %c0_1 = arith.constant 0 : index
    %c0_2 = arith.constant 0 : index
    %3 = vector.load %arg2[%c0, %c0_1, %c0_2] : memref<1x4x256xf32, #tpu.memory_space<vmem>>, vector<1x4x256xf32>
    %4 = vector.shape_cast %3 : vector<1x4x256xf32> to vector<4x256xf32>
    %c0_3 = arith.constant 0 : index
    %c0_4 = arith.constant 0 : index
    %c0_5 = arith.constant 0 : index
    %5 = vector.load %arg3[%c0_3, %c0_4, %c0_5] : memref<1x1x256xi32, #tpu.memory_space<vmem>>, vector<1x1x256xi32>
    %6 = vector.shape_cast %5 : vector<1x1x256xi32> to vector<1x256xi32>
    %c0_i32_6 = arith.constant 0 : i32
    %7 = vector.broadcast %c0_i32_6 : i32 to vector<1x256xi32>
    %8 = arith.cmpi sge, %6, %7 : vector<1x256xi32>
    %9 = arith.extui %8 : vector<1x256xi1> to vector<1x256xi32>
    %10 = arith.sitofp %9 : vector<1x256xi32> to vector<1x256xf32>
    %cst = arith.constant dense<0xFF800000> : vector<256xf32>
    %11 = vector.multi_reduction <maximumf>, %4, %cst [0] : vector<4x256xf32> to vector<256xf32>
    %12 = vector.shape_cast %11 : vector<256xf32> to vector<1x256xf32>
    %13 = vector.broadcast %12 : vector<1x256xf32> to vector<4x256xf32>
    %14 = arith.subf %4, %13 : vector<4x256xf32>
    %15 = math.exp %14 : vector<4x256xf32>
    %cst_7 = arith.constant dense<0.000000e+00> : vector<256xf32>
    %16 = vector.multi_reduction <add>, %15, %cst_7 [0] : vector<4x256xf32> to vector<256xf32>
    %17 = vector.shape_cast %16 : vector<256xf32> to vector<1x256xf32>
    %18 = tpu.reciprocal %17 {approx = true} : vector<1x256xf32> -> vector<1x256xf32>
    %19 = vector.broadcast %18 : vector<1x256xf32> to vector<4x256xf32>
    %20 = arith.mulf %15, %19 : vector<4x256xf32>
    %21 = tpu.iota {dimensions = array<i32: 0>} : vector<4x256xi32>
    %22 = vector.broadcast %6 : vector<1x256xi32> to vector<4x256xi32>
    %23 = arith.cmpi eq, %21, %22 : vector<4x256xi32>
    %24 = arith.extui %23 : vector<4x256xi1> to vector<4x256xi32>
    %25 = arith.sitofp %24 : vector<4x256xi32> to vector<4x256xf32>
    %26 = math.log %17 : vector<1x256xf32>
    %27 = arith.mulf %14, %25 : vector<4x256xf32>
    %cst_8 = arith.constant dense<0.000000e+00> : vector<256xf32>
    %28 = vector.multi_reduction <add>, %27, %cst_8 [0] : vector<4x256xf32> to vector<256xf32>
    %29 = vector.shape_cast %28 : vector<256xf32> to vector<1x256xf32>
    %30 = arith.subf %26, %29 : vector<1x256xf32>
    %c0_9 = arith.constant 0 : index
    %c0_10 = arith.constant 0 : index
    %c0_11 = arith.constant 0 : index
    %31 = vector.load %arg4[%c0_9, %c0_10, %c0_11] : memref<1x1x256xf32, #tpu.memory_space<vmem>>, vector<1x1x256xf32>
    %32 = vector.shape_cast %31 : vector<1x1x256xf32> to vector<1x256xf32>
    %33 = arith.mulf %30, %10 : vector<1x256xf32>
    %34 = arith.addf %32, %33 : vector<1x256xf32>
    %c0_12 = arith.constant 0 : index
    %c0_13 = arith.constant 0 : index
    %c0_14 = arith.constant 0 : index
    %35 = vector.load %arg4[%c0_12, %c0_13, %c0_14] : memref<1x1x256xf32, #tpu.memory_space<vmem>>, vector<1x1x256xf32>
    %36 = vector.shape_cast %35 : vector<1x1x256xf32> to vector<1x256xf32>
    %37 = vector.shape_cast %34 : vector<1x256xf32> to vector<1x1x256xf32>
    tpu.vector_store %arg4[%c0_12, %c0_13, %c0_14], %37 {strides = array<i32>} : memref<1x1x256xf32, #tpu.memory_space<vmem>>, vector<1x1x256xf32>,
    %c0_15 = arith.constant 0 : index
    %c0_16 = arith.constant 0 : index
    %c0_17 = arith.constant 0 : index
    %38 = vector.load %arg5[%c0_15, %c0_16, %c0_17] : memref<1x4x256xf32, #tpu.memory_space<vmem>>, vector<1x4x256xf32>
    %39 = vector.shape_cast %38 : vector<1x4x256xf32> to vector<4x256xf32>
    %40 = arith.mulf %20, %25 : vector<4x256xf32>
    %41 = arith.addf %39, %40 : vector<4x256xf32>
    %c0_18 = arith.constant 0 : index
    %c0_19 = arith.constant 0 : index
    %c0_20 = arith.constant 0 : index
    %42 = vector.load %arg5[%c0_18, %c0_19, %c0_20] : memref<1x4x256xf32, #tpu.memory_space<vmem>>, vector<1x4x256xf32>
    %43 = vector.shape_cast %42 : vector<1x4x256xf32> to vector<4x256xf32>
    %44 = vector.shape_cast %41 : vector<4x256xf32> to vector<1x4x256xf32>
    tpu.vector_store %arg5[%c0_18, %c0_19, %c0_20], %44 {strides = array<i32>} : memref<1x4x256xf32, #tpu.memory_space<vmem>>, vector<1x4x256xf32>,
    %c0_21 = arith.constant 0 : index
    %c0_22 = arith.constant 0 : index
    %c0_23 = arith.constant 0 : index
    %45 = vector.load %arg6[%c0_21, %c0_22, %c0_23] : memref<1x4x256xf32, #tpu.memory_space<vmem>>, vector<1x4x256xf32>
    %46 = vector.shape_cast %45 : vector<1x4x256xf32> to vector<4x256xf32>
    %47 = vector.broadcast %10 : vector<1x256xf32> to vector<4x256xf32>
    %48 = arith.mulf %20, %47 : vector<4x256xf32>
    %49 = arith.addf %46, %48 : vector<4x256xf32>
    %c0_24 = arith.constant 0 : index
    %c0_25 = arith.constant 0 : index
    %c0_26 = arith.constant 0 : index
    %50 = vector.load %arg6[%c0_24, %c0_25, %c0_26] : memref<1x4x256xf32, #tpu.memory_space<vmem>>, vector<1x4x256xf32>
    %51 = vector.shape_cast %50 : vector<1x4x256xf32> to vector<4x256xf32>
    %52 = vector.shape_cast %49 : vector<4x256xf32> to vector<1x4x256xf32>
    tpu.vector_store %arg6[%c0_24, %c0_25, %c0_26], %52 {strides = array<i32>} : memref<1x4x256xf32, #tpu.memory_space<vmem>>, vector<1x4x256xf32>,
    %c0_27 = arith.constant 0 : index
    %c0_28 = arith.constant 0 : index
    %c0_29 = arith.constant 0 : index
    %53 = vector.load %arg7[%c0_27, %c0_28, %c0_29] : memref<1x4x256xf32, #tpu.memory_space<vmem>>, vector<1x4x256xf32>
    %54 = vector.shape_cast %53 : vector<1x4x256xf32> to vector<4x256xf32>
    %55 = arith.addf %54, %25 : vector<4x256xf32>
    %c0_30 = arith.constant 0 : index
    %c0_31 = arith.constant 0 : index
    %c0_32 = arith.constant 0 : index
    %56 = vector.load %arg7[%c0_30, %c0_31, %c0_32] : memref<1x4x256xf32, #tpu.memory_space<vmem>>, vector<1x4x256xf32>
    %57 = vector.shape_cast %56 : vector<1x4x256xf32> to vector<4x256xf32>
    %58 = vector.shape_cast %55 : vector<4x256xf32> to vector<1x4x256xf32>
    tpu.vector_store %arg7[%c0_30, %c0_31, %c0_32], %58 {strides = array<i32>} : memref<1x4x256xf32, #tpu.memory_space<vmem>>, vector<1x4x256xf32>,
    return
  }
  func.func @transform_0(%arg0: i32, %arg1: i32) -> (i32, i32, i32) {
    %c0_i32 = arith.constant 0 : i32
    %c0_i32_0 = arith.constant 0 : i32
    return %arg0, %c0_i32, %arg1 : i32, i32, i32
  }
  func.func @transform_1(%arg0: i32, %arg1: i32) -> (i32, i32, i32) {
    %c0_i32 = arith.constant 0 : i32
    %c0_i32_0 = arith.constant 0 : i32
    return %arg0, %c0_i32, %arg1 : i32, i32, i32
  }
  func.func @transform_2(%arg0: i32, %arg1: i32) -> (i32, i32, i32) {
    %c0_i32 = arith.constant 0 : i32
    %c0_i32_0 = arith.constant 0 : i32
    %c0_i32_1 = arith.constant 0 : i32
    return %arg0, %c0_i32, %c0_i32_0 : i32, i32, i32
  }
  func.func @transform_3(%arg0: i32, %arg1: i32) -> (i32, i32, i32) {
    %c0_i32 = arith.constant 0 : i32
    %c0_i32_0 = arith.constant 0 : i32
    %c0_i32_1 = arith.constant 0 : i32
    return %arg0, %c0_i32, %c0_i32_0 : i32, i32, i32
  }
  func.func @transform_4(%arg0: i32, %arg1: i32) -> (i32, i32, i32) {
    %c0_i32 = arith.constant 0 : i32
    %c0_i32_0 = arith.constant 0 : i32
    %c0_i32_1 = arith.constant 0 : i32
    return %arg0, %c0_i32, %c0_i32_0 : i32, i32, i32
  }
  func.func @transform_5(%arg0: i32, %arg1: i32) -> (i32, i32, i32) {
    %c0_i32 = arith.constant 0 : i32
    %c0_i32_0 = arith.constant 0 : i32
    %c0_i32_1 = arith.constant 0 : i32
    return %arg0, %c0_i32, %c0_i32_0 : i32, i32, i32
  }
}

</mosaic_0001>

<llo_original>
// kernel: tpu_custom_call.1
$region0: #{tpu_custom_call.1}
  #allocation0 [shape = 'u32[]', space=smem, size = 0x4, offset = 0x4, fixed_abs, tag = 'smem constant byte address 0x4 - core index']
  #allocation1 [shape = 'u32[144,128]{1,0:T(1,128)}', space=vmem, size = 0x12000, scoped, tag = 'internal scratch']
  %s0 = inlined_call_operand.hbm [shape: f32[2,4,256], index: 0, kind: input, shape index: {}]
  %s1 = inlined_call_operand.hbm [shape: s32[2,1,256], index: 1, kind: input, shape index: {}]
  %s2 = inlined_call_operand.hbm [shape: f32[2,1,256], index: 2, kind: output, shape index: {0}]
  %s3 = inlined_call_operand.hbm [shape: f32[2,4,256], index: 3, kind: output, shape index: {1}]
  %s4 = inlined_call_operand.hbm [shape: f32[2,4,256], index: 4, kind: output, shape index: {2}]
  %s5 = inlined_call_operand.hbm [shape: f32[2,4,256], index: 5, kind: output, shape index: {3}]
  %6 = xla_tuple %s2, %s3, %s4, %s5
  %s7 = sld [smem:[#allocation0]]
  $region77: #{tpu_custom_call.1} parent=0
    _
  %s9 = ssub.s32 1, %s7
  %s10 = scalar_select 0, %s9, %s7
  $region1: #{tpu_custom_call.1} parent=0
    #allocation2 [shape = 'u8[8192]{0}', space=vmem, size = 0x2000, scoped, tag = 'input window, operand 0']
    #allocation3 [shape = 's32[2]{0}', space=sflag, size = 0x8, scoped, tag = 'scoped memory for tpu_custom_call.1']
    #allocation4 [shape = 's32[2]{0}', space=sflag, size = 0x8, scoped, tag = 'scoped memory for tpu_custom_call.1']
    #allocation5 [shape = 'u8[2048]{0}', space=vmem, size = 0x800, scoped, tag = 'input window, operand 1']
    #allocation6 [shape = 's32[2]{0}', space=sflag, size = 0x8, scoped, tag = 'scoped memory for tpu_custom_call.1']
    #allocation7 [shape = 'u8[2048]{0}', space=vmem, size = 0x800, scoped, tag = 'output window, operand 0']
    #allocation8 [shape = 'u8[8192]{0}', space=vmem, size = 0x2000, scoped, tag = 'output window, operand 1']
    #allocation9 [shape = 's32[2]{0}', space=sflag, size = 0x8, scoped, tag = 'scoped memory for tpu_custom_call.1']
    #allocation10 [shape = 'u8[8192]{0}', space=vmem, size = 0x2000, scoped, tag = 'output window, operand 2']
    #allocation11 [shape = 'u8[8192]{0}', space=vmem, size = 0x2000, scoped, tag = 'output window, operand 3']
    #allocation12 [shape = 's32[2]{0}', space=sflag, size = 0x8, scoped, tag = 'scoped memory for tpu_custom_call.1']
    %11 = vsyncpa [#allocation3], 0
    %s12 = scalar_lea.sflag [#allocation3], 1
    %13 = vsyncpa %s12, 0
    %14 = vsyncpa [#allocation6], 0
    %s15 = scalar_lea.sflag [#allocation6], 1
    %16 = vsyncpa %s15, 0
    %17 = vsyncpa [#allocation4], 0
    %s18 = scalar_lea.sflag [#allocation4], 1
    %19 = vsyncpa %s18, 0
    %20 = vsyncpa [#allocation9], 0
    %s21 = scalar_lea.sflag [#allocation9], 1
    %22 = vsyncpa %s21, 0
    %23 = vsyncpa [#allocation12], 0
    %s24 = scalar_lea.sflag [#allocation12], 1
    %25 = vsyncpa %s24, 0
    loop: start=0, step=1, limit=4
    $region2: #{tpu_custom_call.1} parent=1 // loop_pre_header
      _
    $region3: #{tpu_custom_call.1} parent=1 // loop_header
      %s27 = sphi 0, %s31
      %p28 = scmp.ge.s32.totalorder %s27, 4
      %s34 = sphi 0, %s46
      %s35 = sphi 0, %s42
      %s36 = sphi 0, %s34
      %s37 = sphi 0, %s35
      %s38 = sphi 0, %s36
      %s39 = sphi 0, %s37
      %s51 = sphi 0, %s53
      %s54 = sphi 0, %s51
      %s55 = sphi 0, %s54
      %s71 = sphi 0, %s55
      %s79 = sphi 0, %s81
      %s82 = sphi 0, %s79
      %s83 = sphi 0, %s82
      %s99 = sphi 0, %s83
      %s105 = sphi 0, %s107
      %s108 = sphi 0, %s105
      %s109 = sphi 0, %s108
      %s125 = sphi 0, %s109
      %s131 = sphi 0, %s133
      %s134 = sphi 0, %s131
      %s135 = sphi 0, %s134
      %s151 = sphi 0, %s135
      %s157 = sphi 0, %s159
      %s160 = sphi 0, %s157
      %s161 = sphi 0, %s160
      %s177 = sphi 0, %s161
      %s183 = sphi 0, %s185
      %s186 = sphi 0, %s183
      %s187 = sphi 0, %s186
      %s203 = sphi 0, %s187
    $region4: #{tpu_custom_call.1} parent=1 // loop_header_branch
      %30 = sbr.rel (%p28) target = $region8
    $region5: #{tpu_custom_call.1} parent=1 // loop_body
      %s32 = ssub.s32 %s27, 1
      %s33 = ssub.s32 %s27, 2
      %s40 = sadd.s32 1, %s35
      %p41 = scmp.ge.s32.totalorder %s40, 1
      %s42 = scalar_select %p41, 0, %s40
      %s43 = sadd.s32 1, %s34
      %s44 = scalar_select %p41, %s43, %s34
      %p45 = scmp.ge.s32.totalorder %s44, 2
      %s46 = scalar_select %p45, 0, %s44
      %s47 = ssub.s32 %s34, %s46
      %s48 = ssub.s32 %s35, %s42
      %s49 = sor.u32 %s47, %s48
      %p50 = scmp.eq.s32.totalorder %s49, 0
      %s52 = sadd.s32 %s51, 1
      %s53 = scalar_select %p50, %s51, %s52
      %p56 = pneg %p50
      %p57 = scmp.eq.s32.totalorder %s27, 1
      %p58 = por %p56, %p57
      %p59 = scmp.ne.s32.totalorder %s51, %s54
      %p60 = scmp.eq.s32.totalorder %s27, 0
      %p61 = por %p59, %p60
      %p62 = scmp.ne.s32.totalorder %s51, %s54
      %p63 = scmp.eq.s32.totalorder %s32, 1
      %p64 = por %p62, %p63
      %p65 = scmp.ne.s32.totalorder %s54, %s55
      %p66 = scmp.eq.s32.totalorder %s32, 0
      %p67 = por %p65, %p66
      %p68 = scmp.ne.s32.totalorder %s54, %s55
      %p69 = scmp.eq.s32.totalorder %s33, 1
      %p70 = por %p68, %p69
      %p72 = scmp.ne.s32.totalorder %s55, %s71
      %p73 = scmp.eq.s32.totalorder %s33, 0
      %p74 = por %p72, %p73
      %s75 = ssub.s32 %s34, %s46
      %s76 = ssub.s32 %s35, %s42
      %s77 = sor.u32 %s75, %s76
      %p78 = scmp.eq.s32.totalorder %s77, 0
      %s80 = sadd.s32 %s79, 1
      %s81 = scalar_select %p78, %s79, %s80
      %p84 = pneg %p78
      %p85 = scmp.eq.s32.totalorder %s27, 1
      %p86 = por %p84, %p85
      %p87 = scmp.ne.s32.totalorder %s79, %s82
      %p88 = scmp.eq.s32.totalorder %s27, 0
      %p89 = por %p87, %p88
      %p90 = scmp.ne.s32.totalorder %s79, %s82
      %p91 = scmp.eq.s32.totalorder %s32, 1
      %p92 = por %p90, %p91
      %p93 = scmp.ne.s32.totalorder %s82, %s83
      %p94 = scmp.eq.s32.totalorder %s32, 0
      %p95 = por %p93, %p94
      %p96 = scmp.ne.s32.totalorder %s82, %s83
      %p97 = scmp.eq.s32.totalorder %s33, 1
      %p98 = por %p96, %p97
      %p100 = scmp.ne.s32.totalorder %s83, %s99
      %p101 = scmp.eq.s32.totalorder %s33, 0
      %p102 = por %p100, %p101
      %s103 = ssub.s32 %s34, %s46
      %p104 = scmp.eq.s32.totalorder %s103, 0
      %s106 = sadd.s32 %s105, 1
      %s107 = scalar_select %p104, %s105, %s106
      %p110 = pneg %p104
      %p111 = scmp.eq.s32.totalorder %s27, 1
      %p112 = por %p110, %p111
      %p113 = scmp.ne.s32.totalorder %s105, %s108
      %p114 = scmp.eq.s32.totalorder %s27, 0
      %p115 = por %p113, %p114
      %p116 = scmp.ne.s32.totalorder %s105, %s108
      %p117 = scmp.eq.s32.totalorder %s32, 1
      %p118 = por %p116, %p117
      %p119 = scmp.ne.s32.totalorder %s108, %s109
      %p120 = scmp.eq.s32.totalorder %s32, 0
      %p121 = por %p119, %p120
      %p122 = scmp.ne.s32.totalorder %s108, %s109
      %p123 = scmp.eq.s32.totalorder %s33, 1
      %p124 = por %p122, %p123
      %p126 = scmp.ne.s32.totalorder %s109, %s125
      %p127 = scmp.eq.s32.totalorder %s33, 0
      %p128 = por %p126, %p127
      %s129 = ssub.s32 %s34, %s46
      %p130 = scmp.eq.s32.totalorder %s129, 0
      %s132 = sadd.s32 %s131, 1
      %s133 = scalar_select %p130, %s131, %s132
      %p136 = pneg %p130
      %p137 = scmp.eq.s32.totalorder %s27, 1
      %p138 = por %p136, %p137
      %p139 = scmp.ne.s32.totalorder %s131, %s134
      %p140 = scmp.eq.s32.totalorder %s27, 0
      %p141 = por %p139, %p140
      %p142 = scmp.ne.s32.totalorder %s131, %s134
      %p143 = scmp.eq.s32.totalorder %s32, 1
      %p144 = por %p142, %p143
      %p145 = scmp.ne.s32.totalorder %s134, %s135
      %p146 = scmp.eq.s32.totalorder %s32, 0
      %p147 = por %p145, %p146
      %p148 = scmp.ne.s32.totalorder %s134, %s135
      %p149 = scmp.eq.s32.totalorder %s33, 1
      %p150 = por %p148, %p149
      %p152 = scmp.ne.s32.totalorder %s135, %s151
      %p153 = scmp.eq.s32.totalorder %s33, 0
      %p154 = por %p152, %p153
      %s155 = ssub.s32 %s34, %s46
      %p156 = scmp.eq.s32.totalorder %s155, 0
      %s158 = sadd.s32 %s157, 1
      %s159 = scalar_select %p156, %s157, %s158
      %p162 = pneg %p156
      %p163 = scmp.eq.s32.totalorder %s27, 1
      %p164 = por %p162, %p163
      %p165 = scmp.ne.s32.totalorder %s157, %s160
      %p166 = scmp.eq.s32.totalorder %s27, 0
      %p167 = por %p165, %p166
      %p168 = scmp.ne.s32.totalorder %s157, %s160
      %p169 = scmp.eq.s32.totalorder %s32, 1
      %p170 = por %p168, %p169
      %p171 = scmp.ne.s32.totalorder %s160, %s161
      %p172 = scmp.eq.s32.totalorder %s32, 0
      %p173 = por %p171, %p172
      %p174 = scmp.ne.s32.totalorder %s160, %s161
      %p175 = scmp.eq.s32.totalorder %s33, 1
      %p176 = por %p174, %p175
      %p178 = scmp.ne.s32.totalorder %s161, %s177
      %p179 = scmp.eq.s32.totalorder %s33, 0
      %p180 = por %p178, %p179
      %s181 = ssub.s32 %s34, %s46
      %p182 = scmp.eq.s32.totalorder %s181, 0
      %s184 = sadd.s32 %s183, 1
      %s185 = scalar_select %p182, %s183, %s184
      %p188 = pneg %p182
      %p189 = scmp.eq.s32.totalorder %s27, 1
      %p190 = por %p188, %p189
      %p191 = scmp.ne.s32.totalorder %s183, %s186
      %p192 = scmp.eq.s32.totalorder %s27, 0
      %p193 = por %p191, %p192
      %p194 = scmp.ne.s32.totalorder %s183, %s186
      %p195 = scmp.eq.s32.totalorder %s32, 1
      %p196 = por %p194, %p195
      %p197 = scmp.ne.s32.totalorder %s186, %s187
      %p198 = scmp.eq.s32.totalorder %s32, 0
      %p199 = por %p197, %p198
      %p200 = scmp.ne.s32.totalorder %s186, %s187
      %p201 = scmp.eq.s32.totalorder %s33, 1
      %p202 = por %p200, %p201
      %p204 = scmp.ne.s32.totalorder %s187, %s203
      %p205 = scmp.eq.s32.totalorder %s33, 0
      %p206 = por %p204, %p205
      %p207 = scmp.le.s32.totalorder 1, %s27
      %p208 = scmp.lt.s32.totalorder %s27, 3
      %p209 = pnand %p207, %p208
      %p210 = pneg %p209
      // Predicated region
      $region9: #{tpu_custom_call.1} parent=5 // pred_check
        _
      $region10: #{tpu_custom_call.1} parent=5 // pred_check_branch
        %212 = sbr.rel (%p209) target = $region12
      $region11: #{tpu_custom_call.1} parent=5 // pred_region
        %s213 = ssub.s32 %s27, 1
      $region12: #{tpu_custom_call.1} parent=5 // pred_fallthru
        _
      %p214 = scmp.lt.s32.totalorder %s27, 2
      // Predicated region
      $region13: #{tpu_custom_call.1} parent=5 // pred_check
        %p215 = pneg %p214
      $region14: #{tpu_custom_call.1} parent=5 // pred_check_branch
        %217 = sbr.rel (%p215) target = $region16
      $region15: #{tpu_custom_call.1} parent=5 // pred_region
        // Predicated region
        $region17: #{tpu_custom_call.1} parent=15 // pred_check
          %p218 = pneg %p61
        $region18: #{tpu_custom_call.1} parent=15 // pred_check_branch
          %220 = sbr.rel (%p218) target = $region20
        $region19: #{tpu_custom_call.1} parent=15 // pred_region
          %s221 = sand.u32 %s51, 1
          %s222 = scalar_lea.sflag [#allocation3], %s221
          %s223 = sand.u32 %s51, 1
          %s224 = smul.addr %s223, 8
          %s225 = scalar_lea.vmem [#allocation2], %s224
          %s226 = smul.u32 2, %s35
          %s228 = ssub.s32 128, 128
          %229 = vsyncadd %s222, %s228
          %s230 = smul.addr %s34, 2
          %s231 = sadd.s32 %s226, %s230
          %s232 = smul.addr %s231, 64
          %s233 = scalar_lea.hbm %s0, %s232
          %s235 = sshll.u32 %s225, 4
          %s236 = int_to_ptr.vmem [resolvable:$true] %s235
          %238 = dma.hbm_to_vmem [thread:$0]  %s233, 128, %s236, %s222
        $region20: #{tpu_custom_call.1} parent=15 // pred_fallthru
          _
        // Predicated region
        $region21: #{tpu_custom_call.1} parent=15 // pred_check
          %p239 = pneg %p89
        $region22: #{tpu_custom_call.1} parent=15 // pred_check_branch
          %241 = sbr.rel (%p239) target = $region24
        $region23: #{tpu_custom_call.1} parent=15 // pred_region
          %s242 = sand.u32 %s79, 1
          %s243 = scalar_lea.sflag [#allocation6], %s242
          %s244 = sand.u32 %s79, 1
          %s245 = smul.addr %s244, 2
          %s246 = scalar_lea.vmem [#allocation5], %s245
          %s247 = smul.u32 2, %s35
          %s249 = ssub.s32 32, 32
          %250 = vsyncadd %s243, %s249
          %s251 = smul.addr %s34, 2
          %s252 = sadd.s32 %s247, %s251
          %s253 = smul.addr %s252, 16
          %s254 = scalar_lea.hbm %s1, %s253
          %s256 = sshll.u32 %s246, 4
          %s257 = int_to_ptr.vmem [resolvable:$true] %s256
          %259 = dma.hbm_to_vmem [thread:$0]  %s254, 32, %s257, %s243
        $region24: #{tpu_custom_call.1} parent=15 // pred_fallthru
          _
      $region16: #{tpu_custom_call.1} parent=5 // pred_fallthru
        _
      %p260 = scmp.le.s32.totalorder 1, %s27
      %p261 = scmp.lt.s32.totalorder %s27, 3
      %p262 = pnand %p260, %p261
      %p263 = pneg %p262
      // Predicated region
      $region25: #{tpu_custom_call.1} parent=5 // pred_check
        _
      $region26: #{tpu_custom_call.1} parent=5 // pred_check_branch
        %265 = sbr.rel (%p262) target = $region28
      $region27: #{tpu_custom_call.1} parent=5 // pred_region
        %s266 = ssub.s32 %s27, 1
        %s267 = sand.u32 %s54, 1
        %s268 = scalar_lea.sflag [#allocation3], %s267
        %s269 = sand.u32 %s54, 1
        %s270 = smul.addr %s269, 8
        %s271 = scalar_lea.vmem [#allocation2], %s270
        // Predicated region
        $region29: #{tpu_custom_call.1} parent=27 // pred_check
          %p272 = pneg %p67
        $region30: #{tpu_custom_call.1} parent=27 // pred_check_branch
          %274 = sbr.rel (%p272) target = $region32
        $region31: #{tpu_custom_call.1} parent=27 // pred_region
          %275 = dma.done %s268, 128
        $region32: #{tpu_custom_call.1} parent=27 // pred_fallthru
          _
        %s276 = sand.u32 %s82, 1
        %s277 = scalar_lea.sflag [#allocation6], %s276
        %s278 = sand.u32 %s82, 1
        %s279 = smul.addr %s278, 2
        %s280 = scalar_lea.vmem [#allocation5], %s279
        // Predicated region
        $region33: #{tpu_custom_call.1} parent=27 // pred_check
          %p281 = pneg %p95
        $region34: #{tpu_custom_call.1} parent=27 // pred_check_branch
          %283 = sbr.rel (%p281) target = $region36
        $region35: #{tpu_custom_call.1} parent=27 // pred_region
          %284 = dma.done %s277, 32
        $region36: #{tpu_custom_call.1} parent=27 // pred_fallthru
          _
        %s285 = sand.u32 %s54, 1
        %s286 = scalar_lea.sflag [#allocation3], %s285
        %s287 = sand.u32 %s54, 1
        %s288 = smul.addr %s287, 8
        %s289 = scalar_lea.vmem [#allocation2], %s288
        %p290 = pneg %p67
        %p291 = pneg %p64
        %s292 = sand.u32 %s82, 1
        %s293 = scalar_lea.sflag [#allocation6], %s292
        %s294 = sand.u32 %s82, 1
        %s295 = smul.addr %s294, 2
        %s296 = scalar_lea.vmem [#allocation5], %s295
        %p297 = pneg %p95
        %p298 = pneg %p92
        %p299 = pneg %p121
        %p300 = pneg %p118
        %s301 = sand.u32 %s108, 1
        %s302 = scalar_lea.sflag [#allocation4], %s301
        %s303 = sand.u32 %s108, 1
        %s304 = smul.addr %s303, 2
        %s305 = scalar_lea.vmem [#allocation7], %s304
        %p306 = pneg %p147
        %p307 = pneg %p144
        %s308 = sand.u32 %s32, 1
        %s309 = scalar_lea.sflag [#allocation9], %s308
        %s310 = sand.u32 %s134, 1
        %s311 = smul.addr %s310, 8
        %s312 = scalar_lea.vmem [#allocation8], %s311
        %p313 = pneg %p173
        %p314 = pneg %p170
        %s315 = sand.u32 %s32, 1
        %s316 = scalar_lea.sflag [#allocation9], %s315
        %s317 = sand.u32 %s160, 1
        %s318 = smul.addr %s317, 8
        %s319 = scalar_lea.vmem [#allocation10], %s318
        %p320 = pneg %p199
        %p321 = pneg %p196
        %s322 = sand.u32 %s186, 1
        %s323 = scalar_lea.sflag [#allocation12], %s322
        %s324 = sand.u32 %s186, 1
        %s325 = smul.addr %s324, 8
        %s326 = scalar_lea.vmem [#allocation11], %s325
        %s327 = smul.u32 2, %s37
        %s328 = smul.u32 2, %s37
        %p329 = scmp.eq.s32.totalorder %s37, 0
        // Predicated region
        $region37: #{tpu_custom_call.1} parent=27 // pred_check
          %p330 = pneg %p329
        $region38: #{tpu_custom_call.1} parent=27 // pred_check_branch
          %332 = sbr.rel (%p330) target = $region40
        $region39: #{tpu_custom_call.1} parent=27 // pred_region
          %v333 = vlaneseq
          %vm334 = vcmp.ge.s32.totalorder %v333, 0
          %vm335 = vcmp.lt.s32.totalorder %v333, 256
          %vm336 = vmand %vm334, %vm335
          %337 = vst.msk [vmem:[%s305] sm:$0x3] %vm336, 0.0
          %338 = vst [vmem:[%s312] sm:$0xff] 0.0
          %339 = vst [vmem:[%s319] sm:$0xff] 0.0
          %340 = vst [vmem:[%s326] sm:$0xff] 0.0
        $region40: #{tpu_custom_call.1} parent=27 // pred_fallthru
          _
        %v341 = vld [vmem:[%s271] sm:$0xff]
        %v342 = vld [vmem:[%s280] sm:$0x3]
        %vm343 = vcmp.ge.s32.totalorder %v342, 0
        %v344 = vsel %vm343, 1, 0
        %v345 = vcvt.s32.f32 %v344
        %v347 = vcombine.high %v341, %v341
        %vm349 = vcmask 1043456
        %v350 = vsel %vm349, %v341, -inf
        %v351 = vrot.slane %v350, 4
        %v352 = vmax.f32 %v350, %v351
        %v353 = vrot.slane %v352, 2
        %v354 = vmax.f32 %v352, %v353
        %v355 = vrot.slane %v354, 1
        %v356 = vmax.f32 %v354, %v355
        %v357 = vsel %vm349, %v347, -inf
        %v358 = vrot.slane %v357, 4
        %v359 = vmax.f32 %v357, %v358
        %v360 = vrot.slane %v359, 2
        %v361 = vmax.f32 %v359, %v360
        %v362 = vrot.slane %v361, 1
        %v363 = vmax.f32 %v361, %v362
        %v366 = vcombine.low %v356, %v363
        %v368 = vsub.f32 %v341, %v366
        %v369 = vmul.f32 %v368, 1.442695
        %v370 = vpow.pop %v369
        %v372 = vcombine.high %v370, %v370
        %v374 = vsel %vm349, %v370, 0.0
        %v375 = vrot.slane %v374, 4
        %v376 = vadd.f32 %v374, %v375
        %v377 = vrot.slane %v376, 2
        %v378 = vadd.f32 %v376, %v377
        %v379 = vrot.slane %v378, 1
        %v380 = vadd.f32 %v378, %v379
        %v381 = vsel %vm349, %v372, 0.0
        %v382 = vrot.slane %v381, 4
        %v383 = vadd.f32 %v381, %v382
        %v384 = vrot.slane %v383, 2
        %v385 = vadd.f32 %v383, %v384
        %v386 = vrot.slane %v385, 1
        %v387 = vadd.f32 %v385, %v386
        %v388 = vrcp.pop %v380
        %v389 = vrcp.pop %v387
        %v392 = vcombine.low %v388, %v389
        %v394 = vmul.f32 %v370, %v392
        %v395 = vlaneseq
        %v396 = vshrl.u32 %v395, 7
        %v397 = vlaneseq
        %v398 = vshrl.u32 %v397, 7
        %v399 = vsub.s32 0, %v398
        %v400 = vrot.slane %v342, %v399
        %v401 = vlaneseq
        %v402 = vshrl.u32 %v401, 7
        %v403 = vsub.s32 1, %v402
        %v404 = vrot.slane %v342, %v403
        %vm405 = vcmp.eq.s32.totalorder %v396, %v400
        %vm406 = vcmp.eq.s32.totalorder %v396, %v404
        %v407 = vsel %vm405, 1, 0
        %v408 = vsel %vm406, 1, 0
        %v409 = vcvt.s32.f32 %v407
        %v410 = vcvt.s32.f32 %v408
        %v411 = vlog2.pop %v380
        %v412 = vmul.f32 %v411, 0.6931472
        %v413 = vlog2.pop %v387
        %v414 = vmul.f32 %v413, 0.6931472
        %v417 = vcombine.low %v409, %v410
        %v419 = vmul.f32 %v368, %v417
        %v421 = vcombine.high %v419, %v419
        %v423 = vsel %vm349, %v419, 0.0
        %v424 = vrot.slane %v423, 4
        %v425 = vadd.f32 %v423, %v424
        %v426 = vrot.slane %v425, 2
        %v427 = vadd.f32 %v425, %v426
        %v428 = vrot.slane %v427, 1
        %v429 = vadd.f32 %v427, %v428
        %v430 = vsel %vm349, %v421, 0.0
        %v431 = vrot.slane %v430, 4
        %v432 = vadd.f32 %v430, %v431
        %v433 = vrot.slane %v432, 2
        %v434 = vadd.f32 %v432, %v433
        %v435 = vrot.slane %v434, 1
        %v436 = vadd.f32 %v434, %v435
        %v437 = vsub.f32 %v412, %v429
        %v438 = vsub.f32 %v414, %v436
        %v439 = vld [vmem:[%s305] sm:$0x3]
        %v441 = vlaneseq
        %v442 = vshrl.u32 %v441, 7
        %v443 = vsub.s32 0, %v442
        %v444 = vrot.slane %v345, %v443
        %v445 = vlaneseq
        %v446 = vshrl.u32 %v445, 7
        %v447 = vsub.s32 1, %v446
        %v448 = vrot.slane %v345, %v447
        %v451 = vmul.f32 %v437, %v444
        %v452 = vmul.f32 %v438, %v448
        %v455 = vcombine.low %v451, %v452
        %v457 = vunpack.c.l.s4 1966171168
        %v458 = vunpack.c.0.s8 %v457
        %v459 = vlaneseq
        %v460 = vshrl.u32 %v459, 7
        %v461 = vsub.s32 %v458, %v460
        %v462 = vrot.slane %v455, %v461
        %v464 = vunpack.c.l.s4 1966171168
        %v465 = vunpack.c.0.s8 %v464
        %v466 = vlaneseq
        %v467 = vshrl.u32 %v466, 7
        %v468 = vsub.s32 %v465, %v467
        %v469 = vrot.slane %v462, %v468
        %v471 = vadd.f32 %v439, %v469
        %v472 = vlaneseq
        %vm473 = vcmp.ge.s32.totalorder %v472, 0
        %vm474 = vcmp.lt.s32.totalorder %v472, 256
        %vm475 = vmand %vm473, %vm474
        %476 = vst.msk [vmem:[%s305] sm:$0x3] %vm475, %v471
        %v477 = vld [vmem:[%s312] sm:$0xff]
        %v478 = vmul.f32 %v394, %v417
        %v479 = vadd.f32 %v477, %v478
        %480 = vst [vmem:[%s312] sm:$0xff] %v479
        %v481 = vld [vmem:[%s319] sm:$0xff]
        %v482 = vcombine.low %v444, %v448
        %v484 = vmul.f32 %v394, %v482
        %v485 = vadd.f32 %v481, %v484
        %486 = vst [vmem:[%s319] sm:$0xff] %v485
        %v487 = vld [vmem:[%s326] sm:$0xff]
        %v488 = vadd.f32 %v487, %v417
        %489 = vst [vmem:[%s326] sm:$0xff] %v488
        %s490 = sand.u32 %s108, 1
        %s491 = scalar_lea.sflag [#allocation4], %s490
        %s492 = sand.u32 %s108, 1
        %s493 = smul.addr %s492, 2
        %s494 = scalar_lea.vmem [#allocation7], %s493
        %s495 = sand.u32 %s32, 1
        %s496 = scalar_lea.sflag [#allocation9], %s495
        %s497 = sand.u32 %s134, 1
        %s498 = smul.addr %s497, 8
        %s499 = scalar_lea.vmem [#allocation8], %s498
        %s500 = sand.u32 %s32, 1
        %s501 = scalar_lea.sflag [#allocation9], %s500
        %s502 = sand.u32 %s160, 1
        %s503 = smul.addr %s502, 8
        %s504 = scalar_lea.vmem [#allocation10], %s503
        %s505 = sand.u32 %s186, 1
        %s506 = scalar_lea.sflag [#allocation12], %s505
        %s507 = sand.u32 %s186, 1
        %s508 = smul.addr %s507, 8
        %s509 = scalar_lea.vmem [#allocation11], %s508
        // Predicated region
        $region41: #{tpu_custom_call.1} parent=27 // pred_check
          %p510 = pneg %p118
        $region42: #{tpu_custom_call.1} parent=27 // pred_check_branch
          %512 = sbr.rel (%p510) target = $region44
        $region43: #{tpu_custom_call.1} parent=27 // pred_region
          %s514 = ssub.s32 32, 32
          %515 = vsyncadd %s491, %s514
          %s516 = smul.addr %s36, 2
          %s517 = smul.addr %s516, 16
          %s518 = scalar_lea.hbm %s2, %s517
          %s520 = sshll.u32 %s494, 4
          %s521 = int_to_ptr.vmem [resolvable:$true] %s520
          %523 = dma.vmem_to_hbm [thread:$0]  %s521, 32, %s518, %s491
        $region44: #{tpu_custom_call.1} parent=27 // pred_fallthru
          _
        // Predicated region
        $region45: #{tpu_custom_call.1} parent=27 // pred_check
          %p524 = pneg %p144
        $region46: #{tpu_custom_call.1} parent=27 // pred_check_branch
          %526 = sbr.rel (%p524) target = $region48
        $region47: #{tpu_custom_call.1} parent=27 // pred_region
          %s528 = ssub.s32 128, 128
          %529 = vsyncadd %s496, %s528
          %s530 = smul.addr %s36, 2
          %s531 = smul.addr %s530, 64
          %s532 = scalar_lea.hbm %s3, %s531
          %s534 = sshll.u32 %s499, 4
          %s535 = int_to_ptr.vmem [resolvable:$true] %s534
          %537 = dma.vmem_to_hbm [thread:$0]  %s535, 128, %s532, %s496
        $region48: #{tpu_custom_call.1} parent=27 // pred_fallthru
          _
        // Predicated region
        $region49: #{tpu_custom_call.1} parent=27 // pred_check
          %p538 = pneg %p170
        $region50: #{tpu_custom_call.1} parent=27 // pred_check_branch
          %540 = sbr.rel (%p538) target = $region52
        $region51: #{tpu_custom_call.1} parent=27 // pred_region
          %s542 = ssub.s32 128, 128
          %543 = vsyncadd %s501, %s542
          %s544 = smul.addr %s36, 2
          %s545 = smul.addr %s544, 64
          %s546 = scalar_lea.hbm %s4, %s545
          %s548 = sshll.u32 %s504, 4
          %s549 = int_to_ptr.vmem [resolvable:$true] %s548
          %551 = dma.vmem_to_hbm [thread:$0]  %s549, 128, %s546, %s501
        $region52: #{tpu_custom_call.1} parent=27 // pred_fallthru
          _
        // Predicated region
        $region53: #{tpu_custom_call.1} parent=27 // pred_check
          %p552 = pneg %p196
        $region54: #{tpu_custom_call.1} parent=27 // pred_check_branch
          %554 = sbr.rel (%p552) target = $region56
        $region55: #{tpu_custom_call.1} parent=27 // pred_region
          %s556 = ssub.s32 128, 128
          %557 = vsyncadd %s506, %s556
          %s558 = smul.addr %s36, 2
          %s559 = smul.addr %s558, 64
          %s560 = scalar_lea.hbm %s5, %s559
          %s562 = sshll.u32 %s509, 4
          %s563 = int_to_ptr.vmem [resolvable:$true] %s562
          %565 = dma.vmem_to_hbm [thread:$0]  %s563, 128, %s560, %s506
        $region56: #{tpu_custom_call.1} parent=27 // pred_fallthru
          _
      $region28: #{tpu_custom_call.1} parent=5 // pred_fallthru
        _
      %p566 = scmp.le.s32.totalorder 2, %s27
      // Predicated region
      $region57: #{tpu_custom_call.1} parent=5 // pred_check
        %p567 = pneg %p566
      $region58: #{tpu_custom_call.1} parent=5 // pred_check_branch
        %569 = sbr.rel (%p567) target = $region60
      $region59: #{tpu_custom_call.1} parent=5 // pred_region
        %s570 = ssub.s32 %s27, 2
        // Predicated region
        $region61: #{tpu_custom_call.1} parent=59 // pred_check
          %p571 = pneg %p124
        $region62: #{tpu_custom_call.1} parent=59 // pred_check_branch
          %573 = sbr.rel (%p571) target = $region64
        $region63: #{tpu_custom_call.1} parent=59 // pred_region
          %s574 = sand.u32 %s109, 1
          %s575 = scalar_lea.sflag [#allocation4], %s574
          %s576 = sand.u32 %s109, 1
          %s577 = smul.addr %s576, 2
          %s578 = scalar_lea.vmem [#allocation7], %s577
          %579 = dma.done %s575, 32
        $region64: #{tpu_custom_call.1} parent=59 // pred_fallthru
          _
        // Predicated region
        $region65: #{tpu_custom_call.1} parent=59 // pred_check
          %p580 = pneg %p150
        $region66: #{tpu_custom_call.1} parent=59 // pred_check_branch
          %582 = sbr.rel (%p580) target = $region68
        $region67: #{tpu_custom_call.1} parent=59 // pred_region
          %s583 = sand.u32 %s33, 1
          %s584 = scalar_lea.sflag [#allocation9], %s583
          %s585 = sand.u32 %s135, 1
          %s586 = smul.addr %s585, 8
          %s587 = scalar_lea.vmem [#allocation8], %s586
          %588 = dma.done %s584, 128
        $region68: #{tpu_custom_call.1} parent=59 // pred_fallthru
          _
        // Predicated region
        $region69: #{tpu_custom_call.1} parent=59 // pred_check
          %p589 = pneg %p176
        $region70: #{tpu_custom_call.1} parent=59 // pred_check_branch
          %591 = sbr.rel (%p589) target = $region72
        $region71: #{tpu_custom_call.1} parent=59 // pred_region
          %s592 = sand.u32 %s33, 1
          %s593 = scalar_lea.sflag [#allocation9], %s592
          %s594 = sand.u32 %s161, 1
          %s595 = smul.addr %s594, 8
          %s596 = scalar_lea.vmem [#allocation10], %s595
          %597 = dma.done %s593, 128
        $region72: #{tpu_custom_call.1} parent=59 // pred_fallthru
          _
        // Predicated region
        $region73: #{tpu_custom_call.1} parent=59 // pred_check
          %p598 = pneg %p202
        $region74: #{tpu_custom_call.1} parent=59 // pred_check_branch
          %600 = sbr.rel (%p598) target = $region76
        $region75: #{tpu_custom_call.1} parent=59 // pred_region
          %s601 = sand.u32 %s187, 1
          %s602 = scalar_lea.sflag [#allocation12], %s601
          %s603 = sand.u32 %s187, 1
          %s604 = smul.addr %s603, 8
          %s605 = scalar_lea.vmem [#allocation11], %s604
          %606 = dma.done %s602, 128
        $region76: #{tpu_custom_call.1} parent=59 // pred_fallthru
          _
      $region60: #{tpu_custom_call.1} parent=5 // pred_fallthru
        _
    $region6: #{tpu_custom_call.1} parent=1 // loop_footer
      %s31 = sadd.s32 1, %s27
    $region7: #{tpu_custom_call.1} parent=1 // loop_footer_branch
      %26 = sbr.rel target = $region3
    $region8: #{tpu_custom_call.1} parent=1 // loop_exit
      _
    %607 = vsyncpa [#allocation3], 1
    %s608 = scalar_lea.sflag [#allocation3], 1
    %609 = vsyncpa %s608, 1
    %610 = vsyncpa [#allocation6], 1
    %s611 = scalar_lea.sflag [#allocation6], 1
    %612 = vsyncpa %s611, 1
    %613 = vsyncpa [#allocation4], 1
    %s614 = scalar_lea.sflag [#allocation4], 1
    %615 = vsyncpa %s614, 1
    %616 = vsyncpa [#allocation9], 1
    %s617 = scalar_lea.sflag [#allocation9], 1
    %618 = vsyncpa %s617, 1
    %619 = vsyncpa [#allocation12], 1
    %s620 = scalar_lea.sflag [#allocation12], 1
    %621 = vsyncpa %s620, 1

</llo_original>
